<compile_context>
chip_gen: v5e
topology: v5e:2x2
jax: 0.10.0
libtpu: 0.0.40
codegen_flags: <defaults>
</compile_context>

<pallas_src>
import functools
import numpy as np
import jax
import jax.numpy as jnp
from jax.experimental import pallas as pl
from jax.experimental.pallas import tpu as pltpu


# ------------------------------------------------------------------ parameters

def _xavier_uniform(key, shape):
    # torch.nn.init.xavier_uniform_: fan_in = shape[1]*prod(shape[2:]), fan_out = shape[0]*prod(shape[2:])
    receptive = int(np.prod(shape[2:])) if len(shape) > 2 else 1
    fan_in = shape[1] * receptive
    fan_out = shape[0] * receptive
    a = float(np.sqrt(6.0 / (fan_in + fan_out)))
    return jax.random.uniform(key, shape, jnp.float32, minval=-a, maxval=a)


def init_field_conv_params(key, in_channels, out_channels, band_limit=1, n_rings=6, ftype=1):
    k1, k2, k3 = jax.random.split(key, 3)
    B, R = band_limit, n_rings
    if ftype == 0:
        zonal = _xavier_uniform(k1, (out_channels, in_channels, R))
        spherical = _xavier_uniform(k2, (out_channels, in_channels, R, B, 2))
        phase = jnp.zeros((out_channels, in_channels, B + 1), jnp.float32)
    elif ftype == 1:
        zonal = _xavier_uniform(k1, (out_channels, in_channels, R))
        spherical = _xavier_uniform(k2, (out_channels, in_channels, R, B, 2))
        phase = _xavier_uniform(k3, (out_channels, in_channels, B + 1))
    else:  # ftype == 2, complex-valued filters
        zonal = _xavier_uniform(k1, (out_channels, in_channels, R, 2))
        spherical = _xavier_uniform(k2, (out_channels, in_channels, R, 2 * B, 2))
        phase = jnp.zeros((out_channels, in_channels, B + 1), jnp.float32)
    return dict(zonal=zonal, spherical=spherical, phase=phase, B=B, R=R, ftype=ftype)


def build_filter_weights(params):
    """Assemble complex filter coefficients W[o, c, r, m], m in [-B..B], as (re, im),
    with the 1/(2B+1) normalization folded in (free here, 2 VPU mults/tile inside the kernel)."""
    B, ftype = params["B"], params["ftype"]
    zonal, spherical, phase = params["zonal"], params["spherical"], params["phase"]
    scale = 1.0 / float(2 * B + 1)
    if ftype == 2:  # weightContribComplex
        sph_re, sph_im = spherical[..., 0], spherical[..., 1]          # (Co,Ci,R,2B)
        zon_re, zon_im = zonal[..., 0], zonal[..., 1]                  # (Co,Ci,R)
        coeff_re = jnp.concatenate([sph_re[..., :B], zon_re[..., None], sph_re[..., B:]], axis=3)
        coeff_im = jnp.concatenate([sph_im[..., :B], zon_im[..., None], sph_im[..., B:]], axis=3)
        return coeff_re * scale, coeff_im * scale
    # ftype 0 / 1: coeff = [flip(conj(spherical)), zonal, spherical] along frequency axis
    sph_re, sph_im = spherical[..., 0], spherical[..., 1]              # (Co,Ci,R,B)
    coeff_re = jnp.concatenate([jnp.flip(sph_re, axis=3), zonal[..., None], sph_re], axis=3)
    coeff_im = jnp.concatenate([jnp.flip(-sph_im, axis=3), jnp.zeros_like(zonal)[..., None], sph_im], axis=3)
    if ftype == 1:  # weightContribOffset: phase factor is R-independent, folded into W exactly
        phases = jnp.concatenate([jnp.flip(phase[:, :, 1:], axis=2), phase], axis=-1)  # (Co,Ci,2B+1)
        p_re, p_im = jnp.cos(phases), jnp.sin(phases)
        w_re = coeff_re * p_re[:, :, None, :] - coeff_im * p_im[:, :, None, :]
        w_im = coeff_re * p_im[:, :, None, :] + coeff_im * p_re[:, :, None, :]
        return w_re * scale, w_im * scale
    return coeff_re * scale, coeff_im * scale


# ------------------------------------------------------------------ Pallas kernel

def _round_up(a, m):
    return ((a + m - 1) // m) * m


def _fc_matmul_kernel(c_ref, w_ref, o_ref):
    # Single fused real matmul implementing the complex contraction:
    #   [Tr | Ti] @ [[Wr, Wi], [-Wi, Wr]] = [Yr | Yi], accumulated in f32 on the MXU.
    o_ref[...] = jnp.dot(c_ref[...], w_ref[...], preferred_element_type=jnp.float32)


def field_conv_matmul(c2, wb, *, tile_rows=512):
    """(rows, 2K) @ (2K, 2Co) -> (rows, 2Co) float32, row-tiled Pallas MXU matmul."""
    rows, K2 = c2.shape
    K2w, C2 = wb.shape
    assert K2 == K2w, (K2, K2w)

    # Large row tiles: ~0.35 us fixed overhead per grid step, so amortize it.
    tile = min(int(tile_rows), _round_up(rows, 8))
    rows_p = _round_up(rows, tile)
    if rows_p != rows:
        c2 = jnp.pad(c2, ((0, rows_p - rows), (0, 0)))

    # Explicit scoped-VMEM budget (defaults are only 16/32 MiB depending on chip);
    # double-buffered input/output tiles + weights, capped at 64 MiB (v7x physical VMEM).
    need = 2 * (tile * K2 * c2.dtype.itemsize
                + K2 * C2 * wb.dtype.itemsize
                + tile * C2 * 4)
    vmem_limit = int(min(64 * 1024 * 1024, max(32 * 1024 * 1024, 4 * need)))

    out = pl.pallas_call(
        _fc_matmul_kernel,
        out_shape=jax.ShapeDtypeStruct((rows_p, C2), jnp.float32),
        grid_spec=pltpu.PrefetchScalarGridSpec(
            num_scalar_prefetch=0,
            grid=(rows_p // tile,),
            in_specs=[
                pl.BlockSpec((tile, K2), lambda i: (i, 0)),
                # TODO(synk): the weight block is grid-invariant; pipeline_mode=pl.Buffered(1)
                # would drop its double-buffering and free VMEM at production Cin/Cout.
                pl.BlockSpec((K2, C2), lambda i: (0, 0)),
            ],
            out_specs=pl.BlockSpec((tile, C2), lambda i: (i, 0)),
        ),
        compiler_params=pltpu.CompilerParams(
            dimension_semantics=("parallel",),   # megacore sharding on v7x; no-op on v5e/v6e
            vmem_limit_bytes=vmem_limit,
        ),
    )(c2, wb)
    return out[:rows]


# ------------------------------------------------------------------ forward

def field_conv_forward(params, x_re, x_im, supp_edges, sten_re, sten_im,
                       *, compute_dtype=jnp.bfloat16, tile_rows=512):
    """x: (N, Cin) complex (re/im planes), supp_edges: (E,2) int32, supp_sten: (E,R,2B+1) complex."""
    B, R = params["B"], params["R"]
    N, Cin = x_re.shape
    M = 2 * B + 1
    E = supp_edges.shape[0]
    K = Cin * R * M

    # TODO(synk): softAngle() is not defined in the reference source; approximated
    # here as the complex argument arctan2(im, re) (its value away from the origin).
    phi = jnp.arctan2(x_im, x_re)                                   # (N, Cin)
    m = jnp.arange(-B, B + 1, dtype=jnp.float32)
    freq = -1.0 * m[None, None, :] * phi[..., None]                 # (N, Cin, M)
    rot_re, rot_im = jnp.cos(freq), jnp.sin(freq)
    xt_re = x_re[..., None] * rot_re - x_im[..., None] * rot_im     # x * exp(i*freq)
    xt_im = x_re[..., None] * rot_im + x_im[..., None] * rot_re

    src, tgt = supp_edges[:, 0], supp_edges[:, 1]
    g_re, g_im = xt_re[src], xt_im[src]                             # (E, Cin, M)
    a_re, a_im = g_re[:, :, None, :], g_im[:, :, None, :]
    b_re, b_im = sten_re[:, None, :, :], sten_im[:, None, :, :]
    T_re = (a_re * b_re - a_im * b_im).reshape(E, K)                # (E, K)
    T_im = (a_re * b_im + a_im * b_re).reshape(E, K)

    # Packed real operand for the single fused complex matmul: [re | im] along K.
    c2 = jnp.concatenate([T_re, T_im], axis=1).astype(compute_dtype)            # (E, 2K)

    w_re, w_im = build_filter_weights(params)                       # (Co,Cin,R,M), 1/(2B+1) folded in
    Co = w_re.shape[0]
    wr = w_re.reshape(Co, K).T                                      # (K, Co)
    wi = w_im.reshape(Co, K).T
    wb = jnp.concatenate(
        [jnp.concatenate([wr, wi], axis=1),
         jnp.concatenate([-wi, wr], axis=1)], axis=0).astype(compute_dtype)     # (2K, 2Co)

    z = field_conv_matmul(c2, wb, tile_rows=tile_rows)              # (E, 2Co) f32 per-edge responses

    # TODO(synk): data-dependent scatter over edge targets stays in plain XLA; it now only
    # moves (E, 2*Cout) f32 (the (N, Cin*R*(2B+1)) contrib never exists). A sorted-edges
    # PrefetchScalarGridSpec segment-sum kernel could fuse this final step as well.
    y2 = jnp.zeros((N, 2 * Co), jnp.float32).at[tgt].add(z)
    return jax.lax.complex(y2[:, :Co], y2[:, Co:])                  # (N, Co) complex64


# ------------------------------------------------------------------ numpy reference (float64)

def reference_forward_np(params, x_re, x_im, edges, sten_re, sten_im):
    x = np.asarray(x_re, np.float64) + 1j * np.asarray(x_im, np.float64)
    sten = np.asarray(sten_re, np.float64) + 1j * np.asarray(sten_im, np.float64)
    zonal = np.asarray(params["zonal"], np.float64)
    sph = np.asarray(params["spherical"], np.float64)
    phase = np.asarray(params["phase"], np.float64)
    edges = np.asarray(edges)
    B = params["B"]
    N = x.shape[0]
    phi = np.arctan2(x.imag, x.real)
    m = np.arange(-B, B + 1)
    freq = -1.0 * m[None, None, :] * phi[..., None]
    T = (x[..., None] * np.exp(1j * freq))[edges[:, 0], :, None, :] * sten[:, None, ...]
    contrib = np.zeros((N,) + T.shape[1:], np.complex128)
    np.add.at(contrib, edges[:, 1], T)
    sph_c = sph[..., 0] + 1j * sph[..., 1]
    coeff = np.concatenate([np.conj(sph_c)[:, :, :, ::-1], zonal[..., None].astype(np.complex128), sph_c], axis=3)
    weighted = np.sum(contrib[:, None, ...] * coeff[None, ...], axis=3)
    phases = np.concatenate([phase[:, :, 1:][:, :, ::-1], phase], axis=-1)
    return np.sum(weighted * np.exp(1j * phases)[None, ...], axis=(2, 3)) / (2 * B + 1)


# ------------------------------------------------------------------ main

if __name__ == "__main__":
    N, Cin, Cout, B, R, E = 32, 4, 8, 1, 6, 96
    M = 2 * B + 1

    key = jax.random.PRNGKey(0)
    kp, kx1, kx2, ke1, ke2, ks1, ks2 = jax.random.split(key, 7)

    params = init_field_conv_params(kp, Cin, Cout, band_limit=B, n_rings=R, ftype=1)

    x_re = jax.random.normal(kx1, (N, Cin), jnp.float32)
    x_im = jax.random.normal(kx2, (N, Cin), jnp.float32)
    src = jax.random.randint(ke1, (E,), 0, N, jnp.int32)
    tgt = jax.random.randint(ke2, (E,), 0, N, jnp.int32)
    supp_edges = jnp.stack([src, tgt], axis=1)
    sten_re = jax.random.normal(ks1, (E, R, M), jnp.float32)
    sten_im = jax.random.normal(ks2, (E, R, M), jnp.float32)

    y_ref = reference_forward_np(params, x_re, x_im, supp_edges, sten_re, sten_im)

    # bf16 perf path (default): bf16 operands, f32 MXU accumulation; tolerance sized for bf16.
    fwd_bf16 = jax.jit(functools.partial(field_conv_forward, params, compute_dtype=jnp.bfloat16))
    y = jax.block_until_ready(fwd_bf16(x_re, x_im, supp_edges, sten_re, sten_im))
    assert y.shape == (N, Cout) and y.dtype == jnp.complex64, (y.shape, y.dtype)
    np.testing.assert_allclose(np.asarray(y), y_ref, rtol=3e-2, atol=3e-2)

    # f32 path through the same kernel for a tighter numerical check.
    fwd_f32 = jax.jit(functools.partial(field_conv_forward, params, compute_dtype=jnp.float32))
    y32 = jax.block_until_ready(fwd_f32(x_re, x_im, supp_edges, sten_re, sten_im))
    np.testing.assert_allclose(np.asarray(y32), y_ref, rtol=1e-2, atol=1e-2)

    print("KERNEL_OK")
</pallas_src>

<mosaic_0001>
module attributes {stable_mosaic.version = 11 : i64} {
  func.func @_fc_matmul_kernel(%arg0: i32, %arg1: memref<96x144xbf16, #tpu.memory_space<vmem>>, %arg2: memref<144x16xbf16, #tpu.memory_space<vmem>>, %arg3: memref<96x16xf32, #tpu.memory_space<vmem>>) attributes {dimension_semantics = [#tpu.dimension_semantics<parallel>], iteration_bounds = array<i64: 1>, scalar_prefetch = 0 : i64, scratch_operands = 0 : i64, tpu.core_type = #tpu.core_type<tc>, window_params = [{transform_indices = @transform_0, window_bounds = array<i64: 96, 144>}, {pipeline_mode = #tpu.pipeline_mode<synchronous>, transform_indices = @transform_1, window_bounds = array<i64: 144, 16>}, {transform_indices = @transform_2, window_bounds = array<i64: 96, 16>}]} {
    %c0 = arith.constant 0 : index
    %c0_0 = arith.constant 0 : index
    %0 = vector.load %arg1[%c0, %c0_0] : memref<96x144xbf16, #tpu.memory_space<vmem>>, vector<96x144xbf16>
    %c0_1 = arith.constant 0 : index
    %c0_2 = arith.constant 0 : index
    %1 = vector.load %arg2[%c0_1, %c0_2] : memref<144x16xbf16, #tpu.memory_space<vmem>>, vector<144x16xbf16>
    %cst = arith.constant dense<0.000000e+00> : vector<96x16xf32>
    %2 = tpu.matmul %0, %1, %cst {dimension_numbers = #tpu.dot_dimension_numbers<[1], [0], [0], [1], [0, 0, 1, 1], [], []>} : vector<96x144xbf16>, vector<144x16xbf16>, vector<96x16xf32> -> vector<96x16xf32>
    %c0_3 = arith.constant 0 : index
    %c0_4 = arith.constant 0 : index
    %3 = vector.load %arg3[%c0_3, %c0_4] : memref<96x16xf32, #tpu.memory_space<vmem>>, vector<96x16xf32>
    tpu.vector_store %arg3[%c0_3, %c0_4], %2 {strides = array<i32>} : memref<96x16xf32, #tpu.memory_space<vmem>>, vector<96x16xf32>,
    return
  }
  func.func @transform_0(%arg0: i32) -> (i32, i32) {
    %c0_i32 = arith.constant 0 : i32
    %c0_i32_0 = arith.constant 0 : i32
    return %arg0, %c0_i32 : i32, i32
  }
  func.func @transform_1(%arg0: i32) -> (i32, i32) {
    %c0_i32 = arith.constant 0 : i32
    %c0_i32_0 = arith.constant 0 : i32
    %c0_i32_1 = arith.constant 0 : i32
    return %c0_i32, %c0_i32_0 : i32, i32
  }
  func.func @transform_2(%arg0: i32) -> (i32, i32) {
    %c0_i32 = arith.constant 0 : i32
    %c0_i32_0 = arith.constant 0 : i32
    return %arg0, %c0_i32 : i32, i32
  }
}

</mosaic_0001>

<llo_original>
// kernel: atan2.1
$region0: #{atan2.1}
  #allocation2 [shape = 's32[1]{0}', space=sflag, size = 0x4, scoped, tag = 'scoped memory for atan2.1']
  %s0 = inlined_call_operand.vmem [shape: f32[32,4], index: 0, kind: input, shape index: {}]
  %s1 = inlined_call_operand.hbm [shape: f32[32,4], index: 1, kind: input, shape index: {}]
  %s2 = inlined_call_operand.vmem [shape: f32[32,4], index: 2, kind: output, shape index: {}]
  $region1: #{atan2.1} parent=0
    #allocation0 [shape = 'u8[2048]{0}', space=vmem, size = 0x800, scoped, tag = 'operand span for operand 1']
    #allocation1 [shape = 's32[1]{0}', space=sflag, size = 0x4, scoped, tag = 'scoped memory for atan2.1']
    %3 = vsyncpa [#allocation1], 0
    %5 = vsyncadd [#allocation1], 0
    %s7 = sshll.u32 %s1, 4
    %s8 = int_to_ptr.hbm [resolvable:$true] %s7
    %s9 = sshll.u32 [#allocation0], 4
    %s10 = int_to_ptr.vmem [resolvable:$true] %s9
    %12 = dma.hbm_to_vmem [thread:$0]  %s8, 64, %s10, [#allocation1]
    %14 = dma.done [#allocation1], 64
    %v15 = vld [vmem:[%s0] sm:$0xf]
    %v16 = vld [vmem:[#allocation0] sm:$0xf]
    %v17 = vand.u32 2147483647, %v16
    %v18 = vand.u32 2147483647, %v15
    %v19 = vmin.f32 %v17, %v18
    %v20 = vmax.f32 %v17, %v18
    %v21 = vrcp.pop %v20
    %v22 = vmul.f32 %v20, %v21
    %v23 = vsub.f32 1.0, %v22
    %v24 = vmul.f32 %v21, %v23
    %v25 = vadd.f32 %v21, %v24
    %vm26 = vweird.f32 %v20
    %vm27 = vweird.f32 %v21
    %vm28 = vmor %vm26, %vm27
    %v29 = vsel %vm28, %v21, %v25
    %v30 = vand.u32 2147483647, %v20
    %vm31 = vcmp.eq.f32.partialorder %v30, 8.507059e+37
    %v32 = vand.u32 %v20, 2147483648
    %v33 = vor.u32 1.1754944e-38, %v32
    %v34 = vsel %vm31, %v33, %v29
    %v35 = vmul.f32 %v19, %v34
    %v36 = vmul.f32 %v35, %v35
    %v37 = vmul.f32 0.002785687, %v36
    %v38 = vadd.f32 %v37, -0.015866
    %v39 = vmul.f32 %v38, %v36
    %v40 = vadd.f32 %v39, 0.04247222
    %v41 = vmul.f32 %v40, %v36
    %v42 = vadd.f32 %v41, -0.074975304
    %v43 = vmul.f32 %v42, %v36
    %v44 = vadd.f32 %v43, 0.1064488
    %v45 = vmul.f32 %v44, %v36
    %v46 = vadd.f32 %v45, -0.14207031
    %v47 = vmul.f32 %v46, %v36
    %v48 = vadd.f32 %v47, 0.19993454
    %v49 = vmul.f32 %v48, %v36
    %v50 = vadd.f32 %v49, -0.33333147
    %v51 = vmul.f32 %v50, %v36
    %v52 = vmul.f32 %v51, %v35
    %v53 = vadd.f32 %v52, %v35
    %vm54 = vcmp.gt.f32.partialorder %v18, %v17
    %v55 = vsub.f32 1.5707964, %v53
    %v56 = vsel %vm54, %v55, %v53
    %vm57 = vcmp.lt.f32.partialorder %v16, 0.0
    %v58 = vsub.f32 3.1415927, %v56
    %v59 = vsel %vm57, %v58, %v56
    %vm60 = vcmp.lt.s32.totalorder %v16, 0
    %v61 = vsel %vm60, 3.1415927, 0.0
    %vm62 = vcmp.eq.f32.partialorder %v15, 0.0
    %v63 = vsel %vm62, %v61, %v59
    %vm64 = vcmp.ne.f32.partialorder %v16, %v16
    %vm65 = vcmp.ne.f32.partialorder %v15, %v15
    %vm66 = vmor %vm64, %vm65
    %v67 = vsel %vm66, nan, %v63
    %vm68 = vcmp.lt.f32.partialorder %v16, 0.0
    %v69 = vsel %vm68, 2.3561945, 0.7853982
    %vm70 = vcmp.eq.s32.totalorder %v17, inf
    %vm71 = vcmp.eq.s32.totalorder %v18, inf
    %vm72 = vmand %vm70, %vm71
    %v73 = vsel %vm72, %v69, %v67
    %v74 = vand.u32 2147483647, %v73
    %v75 = vand.u32 %v15, 2147483648
    %v76 = vor.u32 %v74, %v75
    %77 = vst [vmem:[%s2] sm:$0xf] %v76
    %78 = vsyncpa [#allocation1], 1

// kernel: custom-call
$region0: #{custom-call}
  %s0 = inlined_call_operand.vmem [shape: f32[32,8], index: 0, kind: input, shape index: {}]
  %s1 = inlined_call_operand.vmem [shape: f32[32,8], index: 1, kind: input, shape index: {}]
  %s2 = inlined_call_operand.vmem [shape: c64[32,8], index: 2, kind: output, shape index: {}]
  %s3 = scalar_lea.vmem %s2, 32
  %v4 = vld [vmem:[%s0] sm:$0xff]
  %5 = vst [vmem:[%s2] sm:$0xff] %v4
  %s6 = scalar_lea.vmem %s2, 8
  %s7 = scalar_lea.vmem %s0, 8
  %v8 = vld [vmem:[%s7] sm:$0xff]
  %9 = vst [vmem:[%s6] sm:$0xff] %v8
  %s10 = scalar_lea.vmem %s2, 16
  %s11 = scalar_lea.vmem %s0, 16
  %v12 = vld [vmem:[%s11] sm:$0xff]
  %13 = vst [vmem:[%s10] sm:$0xff] %v12
  %s14 = scalar_lea.vmem %s2, 24
  %s15 = scalar_lea.vmem %s0, 24
  %v16 = vld [vmem:[%s15] sm:$0xff]
  %17 = vst [vmem:[%s14] sm:$0xff] %v16
  %v18 = vld [vmem:[%s1] sm:$0xff]
  %19 = vst [vmem:[%s3] sm:$0xff] %v18
  %s20 = scalar_lea.vmem %s3, 8
  %s21 = scalar_lea.vmem %s1, 8
  %v22 = vld [vmem:[%s21] sm:$0xff]
  %23 = vst [vmem:[%s20] sm:$0xff] %v22
  %s24 = scalar_lea.vmem %s3, 16
  %s25 = scalar_lea.vmem %s1, 16
  %v26 = vld [vmem:[%s25] sm:$0xff]
  %27 = vst [vmem:[%s24] sm:$0xff] %v26
  %s28 = scalar_lea.vmem %s3, 24
  %s29 = scalar_lea.vmem %s1, 24
  %v30 = vld [vmem:[%s29] sm:$0xff]
  %31 = vst [vmem:[%s28] sm:$0xff] %v30

// kernel: field_conv_forward.1
$region0: #{field_conv_forward.1}
  #allocation0 [shape = 'u32[]', space=smem, size = 0x4, offset = 0x4, fixed_abs, tag = 'smem constant byte address 0x4 - core index']
  #allocation1 [shape = 'u32[72,128]{1,0:T(1,128)}', space=vmem, size = 0x9000, scoped, tag = 'internal scratch']
  %s0 = inlined_call_operand.vmem [shape: bf16[96,144], index: 0, kind: input, shape index: {}]
  %s1 = inlined_call_operand.vmem [shape: bf16[144,16], index: 1, kind: input, shape index: {}]
  %s2 = inlined_call_operand.vmem [shape: f32[96,16], index: 2, kind: output, shape index: {}]
  %s3 = sld [smem:[#allocation0]]
  $region18: #{field_conv_forward.1} parent=0
    _
  %s5 = ssub.s32 1, %s3
  %s6 = scalar_select 0, %s5, %s3
  // Predicated region
  $region2: #{field_conv_forward.1} parent=0 // pred_check
    _
  $region3: #{field_conv_forward.1} parent=0 // pred_check_branch
    %8 = sbr.rel (0) target = $region5
  $region4: #{field_conv_forward.1} parent=0 // pred_region
    _
  $region5: #{field_conv_forward.1} parent=0 // pred_fallthru
    _
  // Predicated region
  $region6: #{field_conv_forward.1} parent=0 // pred_check
    _
  $region7: #{field_conv_forward.1} parent=0 // pred_check_branch
    %10 = sbr.rel (0) target = $region9
  $region8: #{field_conv_forward.1} parent=0 // pred_region
    _
  $region9: #{field_conv_forward.1} parent=0 // pred_fallthru
    _
  %v12 = vld [vmem:[%s0] sm:$0xff]
  %v13 = vld [vmem:[%s0 + $0x8] sm:$0xff]
  %v14 = vld [vmem:[%s0 + $0x10] sm:$0xff]
  %v15 = vld [vmem:[%s0 + $0x18] sm:$0xff]
  %v16 = vld [vmem:[%s0 + $0x20] sm:$0xff]
  %v17 = vld [vmem:[%s0 + $0x28] sm:$0xff]
  %v18 = vld [vmem:[%s0 + $0x30] sm:$0xff]
  %v19 = vld [vmem:[%s0 + $0x38] sm:$0xff]
  %v20 = vld [vmem:[%s0 + $0x40] sm:$0xff]
  %v21 = vld [vmem:[%s0 + $0x48] sm:$0xff]
  %v22 = vld [vmem:[%s0 + $0x50] sm:$0xff]
  %v23 = vld [vmem:[%s0 + $0x58] sm:$0xff]
  %v24 = vld [vmem:[%s1] sm:$0xf]
  %v25 = vld [vmem:[%s1 + $0x4] sm:$0xf]
  %v26 = vld [vmem:[%s1 + $0x8] sm:$0xf]
  %v27 = vld [vmem:[%s1 + $0xc] sm:$0xf]
  %v28 = vld [vmem:[%s1 + $0x10] sm:$0xf]
  %v29 = vld [vmem:[%s1 + $0x14] sm:$0xf]
  %v30 = vld [vmem:[%s1 + $0x18] sm:$0xf]
  %v31 = vld [vmem:[%s1 + $0x1c] sm:$0xf]
  %v32 = vld [vmem:[%s1 + $0x20] sm:$0xf]
  %v33 = vld [vmem:[%s1 + $0x24] sm:$0xf]
  %v34 = vld [vmem:[%s1 + $0x28] sm:$0xf]
  %v35 = vld [vmem:[%s1 + $0x2c] sm:$0xf]
  %v36 = vld [vmem:[%s1 + $0x30] sm:$0xf]
  %v37 = vld [vmem:[%s1 + $0x34] sm:$0xf]
  %v38 = vld [vmem:[%s1 + $0x38] sm:$0xf]
  %v39 = vld [vmem:[%s1 + $0x3c] sm:$0xf]
  %v40 = vld [vmem:[%s1 + $0x40] sm:$0xf]
  %v41 = vld [vmem:[%s1 + $0x44] sm:$0xf]
  %v54 = vunpack.c.l.b16 %v12
  %v55 = vunpack.c.h.b16 %v12
  %v56 = vunpack.c.l.b16 %v13
  %v57 = vunpack.c.h.b16 %v13
  %v58 = vunpack.c.l.b16 %v14
  %v59 = vunpack.c.h.b16 %v14
  %v60 = vunpack.c.l.b16 %v15
  %v61 = vunpack.c.h.b16 %v15
  %v62 = vunpack.c.l.b16 %v16
  %v63 = vunpack.c.h.b16 %v16
  %v64 = vunpack.c.l.b16 %v17
  %v65 = vunpack.c.h.b16 %v17
  %v66 = vunpack.c.l.b16 %v18
  %v67 = vunpack.c.h.b16 %v18
  %v68 = vunpack.c.l.b16 %v19
  %v69 = vunpack.c.h.b16 %v19
  %v70 = vunpack.c.l.b16 %v20
  %v71 = vunpack.c.h.b16 %v20
  %v72 = vunpack.c.l.b16 %v21
  %v73 = vunpack.c.h.b16 %v21
  %v74 = vunpack.c.l.b16 %v22
  %v75 = vunpack.c.h.b16 %v22
  %v76 = vunpack.c.l.b16 %v23
  %v77 = vunpack.c.h.b16 %v23
  %v78 = vpack.c.b16 %v56, %v54
  %v79 = vpack.c.b16 %v57, %v55
  %v80 = vpack.c.b16 %v60, %v58
  %v81 = vpack.c.b16 %v61, %v59
  %v82 = vpack.c.b16 %v64, %v62
  %v83 = vpack.c.b16 %v65, %v63
  %v84 = vpack.c.b16 %v68, %v66
  %v85 = vpack.c.b16 %v69, %v67
  %v86 = vpack.c.b16 %v72, %v70
  %v87 = vpack.c.b16 %v73, %v71
  %v88 = vpack.c.b16 %v76, %v74
  %v89 = vpack.c.b16 %v77, %v75
  %v114 = vunpack.c.l.b16 %v24
  %v115 = vunpack.c.l.b16 %v25
  %v116 = vunpack.c.l.b16 %v26
  %v117 = vunpack.c.l.b16 %v27
  %v118 = vunpack.c.l.b16 %v28
  %v119 = vunpack.c.l.b16 %v29
  %v120 = vunpack.c.l.b16 %v30
  %v121 = vunpack.c.l.b16 %v31
  %v122 = vunpack.c.l.b16 %v32
  %v123 = vunpack.c.l.b16 %v33
  %v124 = vunpack.c.l.b16 %v34
  %v125 = vunpack.c.l.b16 %v35
  %v126 = vunpack.c.l.b16 %v36
  %v127 = vunpack.c.l.b16 %v37
  %v128 = vunpack.c.l.b16 %v38
  %v129 = vunpack.c.l.b16 %v39
  %v130 = vunpack.c.l.b16 %v40
  %v131 = vunpack.c.l.b16 %v41
  %v132 = vpack.c.b16 %v115, %v114
  %v133 = vpack.c.b16 %v117, %v116
  %v134 = vpack.c.b16 %v119, %v118
  %v135 = vpack.c.b16 %v121, %v120
  %v136 = vpack.c.b16 %v123, %v122
  %v137 = vpack.c.b16 %v125, %v124
  %v138 = vpack.c.b16 %v127, %v126
  %v139 = vpack.c.b16 %v129, %v128
  %v140 = vpack.c.b16 %v131, %v130
  %vm150 = vcmask 130048
  %v152 = vsel %vm150, %v79, 0
  %v155 = vsel %vm150, %v81, 0
  %v158 = vsel %vm150, %v83, 0
  %v161 = vsel %vm150, %v85, 0
  %v164 = vsel %vm150, %v87, 0
  %v167 = vsel %vm150, %v89, 0
  %169 = vmatpush.bf16.msra.mxu0 %v139
  %170 = vmatpush.bf16.msra.mxu0 %v138
  %171 = vmatpush.bf16.msra.mxu0 %v137
  %172 = vmatpush.bf16.msra.mxu0 %v136
  %173 = vmatpush.bf16.msra.mxu0 %v135
  %174 = vmatpush.bf16.msra.mxu0 %v134
  %175 = vmatpush.bf16.msra.mxu0 %v133
  %176 = vmatpush.bf16.msra.mxu0 %v132
  %177 = vmatmul.bf16.gmra.mxu0 %v78
  %v178 = vpop.f32.mrf.mxu0
  %v179 = vadd.f32 0.0, %v178
  %v180 = vpop.f32.mrf.mxu0
  %v181 = vadd.f32 0.0, %v180
  %182 = vmatmul.bf16.gmra.mxu0 %v80
  %v183 = vpop.f32.mrf.mxu0
  %v184 = vadd.f32 0.0, %v183
  %v185 = vpop.f32.mrf.mxu0
  %v186 = vadd.f32 0.0, %v185
  %187 = vmatmul.bf16.gmra.mxu0 %v82
  %v188 = vpop.f32.mrf.mxu0
  %v189 = vadd.f32 0.0, %v188
  %v190 = vpop.f32.mrf.mxu0
  %v191 = vadd.f32 0.0, %v190
  %192 = vmatmul.bf16.gmra.mxu0 %v84
  %v193 = vpop.f32.mrf.mxu0
  %v194 = vadd.f32 0.0, %v193
  %v195 = vpop.f32.mrf.mxu0
  %v196 = vadd.f32 0.0, %v195
  %197 = vmatmul.bf16.gmra.mxu0 %v86
  %v198 = vpop.f32.mrf.mxu0
  %v199 = vadd.f32 0.0, %v198
  %v200 = vpop.f32.mrf.mxu0
  %v201 = vadd.f32 0.0, %v200
  %202 = vmatmul.bf16.gmra.mxu0 %v88
  %v203 = vpop.f32.mrf.mxu0
  %v204 = vadd.f32 0.0, %v203
  %v205 = vpop.f32.mrf.mxu0
  %v206 = vadd.f32 0.0, %v205
  %207 = vdwg.mxu0
  %208 = vmatpush.bf16.msra.mxu0 0
  %209 = vmatpush.bf16.msra.mxu0 0
  %210 = vmatpush.bf16.msra.mxu0 0
  %211 = vmatpush.bf16.msra.mxu0 0
  %212 = vmatpush.bf16.msra.mxu0 0
  %213 = vmatpush.bf16.msra.mxu0 0
  %214 = vmatpush.bf16.msra.mxu0 0
  %215 = vmatpush.bf16.msra.mxu0 %v140
  %216 = vmatmul.bf16.gmra.mxu0 %v152
  %v217 = vpop.f32.mrf.mxu0
  %v218 = vadd.f32 %v179, %v217
  %v219 = vpop.f32.mrf.mxu0
  %v220 = vadd.f32 %v181, %v219
  %221 = vmatmul.bf16.gmra.mxu0 %v155
  %v222 = vpop.f32.mrf.mxu0
  %v223 = vadd.f32 %v184, %v222
  %v224 = vpop.f32.mrf.mxu0
  %v225 = vadd.f32 %v186, %v224
  %226 = vmatmul.bf16.gmra.mxu0 %v158
  %v227 = vpop.f32.mrf.mxu0
  %v228 = vadd.f32 %v189, %v227
  %v229 = vpop.f32.mrf.mxu0
  %v230 = vadd.f32 %v191, %v229
  %231 = vmatmul.bf16.gmra.mxu0 %v161
  %v232 = vpop.f32.mrf.mxu0
  %v233 = vadd.f32 %v194, %v232
  %v234 = vpop.f32.mrf.mxu0
  %v235 = vadd.f32 %v196, %v234
  %236 = vmatmul.bf16.gmra.mxu0 %v164
  %v237 = vpop.f32.mrf.mxu0
  %v238 = vadd.f32 %v199, %v237
  %v239 = vpop.f32.mrf.mxu0
  %v240 = vadd.f32 %v201, %v239
  %241 = vmatmul.bf16.gmra.mxu0 %v167
  %v242 = vpop.f32.mrf.mxu0
  %v243 = vadd.f32 %v204, %v242
  %v244 = vpop.f32.mrf.mxu0
  %v245 = vadd.f32 %v206, %v244
  %246 = vdwg.mxu0
  %247 = vst.msk [vmem:[%s2] sm:$0xff] %vm150, %v218
  %248 = vst.msk [vmem:[%s2 + $0x8] sm:$0xff] %vm150, %v220
  %249 = vst.msk [vmem:[%s2 + $0x10] sm:$0xff] %vm150, %v223
  %250 = vst.msk [vmem:[%s2 + $0x18] sm:$0xff] %vm150, %v225
  %251 = vst.msk [vmem:[%s2 + $0x20] sm:$0xff] %vm150, %v228
  %252 = vst.msk [vmem:[%s2 + $0x28] sm:$0xff] %vm150, %v230
  %253 = vst.msk [vmem:[%s2 + $0x30] sm:$0xff] %vm150, %v233
  %254 = vst.msk [vmem:[%s2 + $0x38] sm:$0xff] %vm150, %v235
  %255 = vst.msk [vmem:[%s2 + $0x40] sm:$0xff] %vm150, %v238
  %256 = vst.msk [vmem:[%s2 + $0x48] sm:$0xff] %vm150, %v240
  %257 = vst.msk [vmem:[%s2 + $0x50] sm:$0xff] %vm150, %v243
  %258 = vst.msk [vmem:[%s2 + $0x58] sm:$0xff] %vm150, %v245
  // Predicated region
  $region10: #{field_conv_forward.1} parent=0 // pred_check
    _
  $region11: #{field_conv_forward.1} parent=0 // pred_check_branch
    %260 = sbr.rel (0) target = $region13
  $region12: #{field_conv_forward.1} parent=0 // pred_region
    _
  $region13: #{field_conv_forward.1} parent=0 // pred_fallthru
    _
  // Predicated region
  $region14: #{field_conv_forward.1} parent=0 // pred_check
    _
  $region15: #{field_conv_forward.1} parent=0 // pred_check_branch
    %262 = sbr.rel (0) target = $region17
  $region16: #{field_conv_forward.1} parent=0 // pred_region
    _
  $region17: #{field_conv_forward.1} parent=0 // pred_fallthru
    _

</llo_original>
